<compile_context>
chip_gen: v6e
topology: v6e:2x2x1
jax: 0.10.0
libtpu: 0.0.40
codegen_flags: <defaults>
</compile_context>

<pallas_src>
import functools

import jax
import jax.numpy as jnp
from jax.experimental import pallas as pl
from jax.experimental.pallas import tpu as pltpu

_C_PAD = 128  # lane-dense channel padding


# ---------------------------------------------------------------------------
# Kernel: one GCN layer
#   out = d^-1/2 * (A_hat @ (X_scaled @ W)) + b   [optionally relu, pre-scale]
#   A_hat: int8 (tm, tk) tiles; X_scaled: (tk, Fx) K-tiles; W/bias resident.
# ---------------------------------------------------------------------------
def _gcn_fused_kernel(a_ref, x_ref, w_ref, b_ref, d_ref, o_ref, acc_ref,
                      *, apply_relu, prescale_out):
    k = pl.program_id(1)

    @pl.when(k == 0)
    def _init():
        acc_ref[...] = jnp.zeros_like(acc_ref)

    # Fused feature transform: z_blk = X[k_tile] @ W (bf16 MXU, f32 accum).
    z_blk = jnp.dot(
        x_ref[...], w_ref[...], preferred_element_type=jnp.float32
    ).astype(jnp.bfloat16)

    # A_hat is exact {0,1,2} stored as int8; upcast to bf16 for the MXU.
    a_blk = a_ref[...].astype(jnp.float32).astype(jnp.bfloat16)
    acc_ref[...] += jnp.dot(a_blk, z_blk, preferred_element_type=jnp.float32)

    # Normalization / bias / activation only once, in the reduction epilogue.
    @pl.when(k == pl.num_programs(1) - 1)
    def _finalize():
        d = d_ref[...]                              # (tm, 1) rows of d^-1/2
        r = d * acc_ref[...] + b_ref[...]
        if apply_relu:
            r = jnp.maximum(r, 0.0)
        if prescale_out:
            r = d * r      # pre-apply next layer's folded column normalization
        o_ref[...] = r.astype(o_ref.dtype)


# ---------------------------------------------------------------------------
# pallas_call wrapper
# ---------------------------------------------------------------------------
def _vmem_limit_bytes(tm, tk, fx, out_dtype):
    out_b = jnp.dtype(out_dtype).itemsize
    need = (
        2 * tm * tk * 1                 # A_hat int8 tiles, double-buffered
        + 2 * tk * fx * 2               # X bf16 K-tiles, double-buffered
        + 2 * tm * _C_PAD * out_b       # output tiles, double-buffered
        + tm * _C_PAD * 4               # f32 accumulator scratch
        + 2 * (fx * _C_PAD * 2 + _C_PAD * 4 + tm * 4)  # W / bias / d^-1/2
    )
    need = int(need * 1.5) + (4 << 20)  # slack for compiler-internal scratch
    # Raise above small default scoped limits (16 MiB on v5e) when needed, but
    # stay comfortably under v7x's 64 MiB/TC physical VMEM.
    return min(max(need, 16 << 20), 48 << 20)


def _gcn_layer(a_hat, x_bf16, w_bf16, b_f32, d_col, tm, tk,
               *, apply_relu, prescale_out, out_dtype):
    n_pad = a_hat.shape[0]
    fx = x_bf16.shape[1]
    c = w_bf16.shape[1]
    kernel = functools.partial(
        _gcn_fused_kernel, apply_relu=apply_relu, prescale_out=prescale_out)
    cost = pl.CostEstimate(
        flops=2 * n_pad * n_pad * c + 2 * (n_pad // tm) * n_pad * fx * c,
        transcendentals=0,
        bytes_accessed=(
            n_pad * n_pad * a_hat.dtype.itemsize
            + (n_pad // tm) * n_pad * fx * 2
            + n_pad * c * jnp.dtype(out_dtype).itemsize
        ),
    )
    return pl.pallas_call(
        kernel,
        grid=(n_pad // tm, n_pad // tk),
        out_shape=jax.ShapeDtypeStruct((n_pad, c), out_dtype),
        in_specs=[
            pl.BlockSpec((tm, tk), lambda i, k: (i, k)),   # A_hat int8 tiles
            pl.BlockSpec((tk, fx), lambda i, k: (k, 0)),   # X K-tiles (fused)
            pl.BlockSpec((fx, c), lambda i, k: (0, 0)),    # W resident (small)
            pl.BlockSpec((1, c), lambda i, k: (0, 0)),     # bias resident
            pl.BlockSpec((tm, 1), lambda i, k: (i, 0)),    # d^-1/2 row tile
        ],
        out_specs=pl.BlockSpec((tm, c), lambda i, k: (i, 0)),
        scratch_shapes=[pltpu.VMEM((tm, c), jnp.float32)],
        compiler_params=pltpu.CompilerParams(
            dimension_semantics=("parallel", "arbitrary"),
            vmem_limit_bytes=_vmem_limit_bytes(tm, tk, fx, out_dtype),
        ),
        cost_estimate=cost,
    )(a_hat, x_bf16, w_bf16, b_f32, d_col)


# ---------------------------------------------------------------------------
# Graph preprocessing (single int8 N^2 buffer, no f32 N^2 temporaries)
# ---------------------------------------------------------------------------
def build_graph_operands(edge_index, num_nodes, n_pad):
    """A_hat = A + I as int8 (padded to n_pad) and d^-1/2 (f32, padded)."""
    src, dst = edge_index[0], edge_index[1]
    a_hat = jnp.zeros((n_pad, n_pad), jnp.int8).at[dst, src].set(jnp.int8(1))
    diag = jnp.arange(num_nodes, dtype=jnp.int32)
    a_hat = a_hat.at[diag, diag].add(jnp.int8(1))   # self-loops (matches A + I)
    deg = jnp.sum(a_hat, axis=1, dtype=jnp.float32)
    d_inv_sqrt = jnp.where(deg > 0.0, jax.lax.rsqrt(jnp.maximum(deg, 1.0)), 0.0)
    return a_hat, d_inv_sqrt


# ---------------------------------------------------------------------------
# Tile selection
# ---------------------------------------------------------------------------
def _round_up(n, m):
    return ((n + m - 1) // m) * m


def _pick_tile(n, pref):
    """Largest multiple of 128 <= pref dividing n (n must be a multiple of 128)."""
    t = max(128, (min(pref, n) // 128) * 128)
    while n % t != 0:
        t -= 128
    return t


# ---------------------------------------------------------------------------
# Forward pass
# ---------------------------------------------------------------------------
def variational_gcn_encoder(x, edge_index, params, *, tm=None, tk=None):
    """Forward pass of VariationalGCNEncoder. Returns (mu, logstd)."""
    n, f_in = x.shape
    w1, b1 = params["w1"], params["b1"]
    w_mu, b_mu = params["w_mu"], params["b_mu"]
    w_ls, b_ls = params["w_logstd"], params["b_logstd"]
    hid = w1.shape[1]
    out = w_mu.shape[1]
    assert hid <= _C_PAD and 2 * out <= _C_PAD, "channel dims exceed lane padding"

    n_pad = _round_up(n, 128)
    if tm is None:
        # Keep n_pad // tm >= 2 so the parallel row axis shards across v7x TCs.
        tm = _pick_tile(n_pad, min(512, max(n_pad // 2, 128)))
    if tk is None:
        tk = _pick_tile(n_pad, 2048)
    assert n_pad % tm == 0 and n_pad % tk == 0
    assert tm % 128 == 0 and tk % 128 == 0

    # int8 A_hat (dominant HBM array: 1 byte/elem) and folded normalization.
    a_hat, d_inv_sqrt = build_graph_operands(edge_index, n, n_pad)
    d_col = d_inv_sqrt[:, None]                       # (n_pad, 1) f32

    # Pad node features to n_pad rows and fold the column D^-1/2 into them.
    x_pad = jnp.zeros((n_pad, f_in), jnp.float32).at[:n].set(x.astype(jnp.float32))
    x_scaled = (d_col * x_pad).astype(jnp.bfloat16)

    # Lane-dense padded weights; mu & logstd fused into one weight.
    w1_pad = (jnp.zeros((f_in, _C_PAD), jnp.float32)
              .at[:, :hid].set(w1)).astype(jnp.bfloat16)
    b1_pad = jnp.zeros((1, _C_PAD), jnp.float32).at[0, :hid].set(b1)
    wcat = jnp.concatenate([w_mu, w_ls], axis=1)      # (hid, 2*out)
    wcat_pad = (jnp.zeros((_C_PAD, _C_PAD), jnp.float32)
                .at[:hid, : 2 * out].set(wcat)).astype(jnp.bfloat16)
    bcat_pad = (jnp.zeros((1, _C_PAD), jnp.float32)
                .at[0, :out].set(b_mu)
                .at[0, out: 2 * out].set(b_ls))

    # Layer 1: H_scaled = d^-1/2 * relu(d^-1/2 * (A_hat @ (X_scaled @ W1)) + b1)
    h_scaled = _gcn_layer(a_hat, x_scaled, w1_pad, b1_pad, d_col, tm, tk,
                          apply_relu=True, prescale_out=True,
                          out_dtype=jnp.bfloat16)

    # Layer 2: [mu | logstd] = d^-1/2 * (A_hat @ (H_scaled @ [Wmu|Wls])) + bcat
    muls = _gcn_layer(a_hat, h_scaled, wcat_pad, bcat_pad, d_col, tm, tk,
                      apply_relu=False, prescale_out=False,
                      out_dtype=jnp.float32)

    mu = muls[:n, :out]
    logstd = muls[:n, out: 2 * out]
    return mu, logstd


# ---------------------------------------------------------------------------
# Params & pure-JAX reference (mirrors kernel's bf16 operand rounding)
# ---------------------------------------------------------------------------
def init_params(key, in_channels, out_channels):
    hid = 2 * out_channels
    ks = jax.random.split(key, 3)

    def glorot(k, fan_in, fan_out):
        lim = jnp.sqrt(6.0 / (fan_in + fan_out))
        return jax.random.uniform(k, (fan_in, fan_out), jnp.float32, -lim, lim)

    return {
        "w1": glorot(ks[0], in_channels, hid),
        "b1": jnp.zeros((hid,), jnp.float32),
        "w_mu": glorot(ks[1], hid, out_channels),
        "b_mu": jnp.zeros((out_channels,), jnp.float32),
        "w_logstd": glorot(ks[2], hid, out_channels),
        "b_logstd": jnp.zeros((out_channels,), jnp.float32),
    }


def _reference_forward(x, edge_index, params):
    hi = jax.lax.Precision.HIGHEST

    def bf(v):
        return v.astype(jnp.bfloat16).astype(jnp.float32)

    n = x.shape[0]
    a_hat, dis = build_graph_operands(edge_index, n, n)
    a = a_hat.astype(jnp.float32)
    dcol = dis[:, None]

    xs = bf(dcol * x)
    z1 = bf(jnp.dot(xs, bf(params["w1"]), precision=hi))
    h = jnp.maximum(dcol * jnp.dot(a, z1, precision=hi) + params["b1"], 0.0)
    hs = bf(dcol * h)

    wcat = jnp.concatenate([params["w_mu"], params["w_logstd"]], axis=1)
    bcat = jnp.concatenate([params["b_mu"], params["b_logstd"]])
    z2 = bf(jnp.dot(hs, bf(wcat), precision=hi))
    outm = dcol * jnp.dot(a, z2, precision=hi) + bcat
    o = params["w_mu"].shape[1]
    return outm[:, :o], outm[:, o: 2 * o]


if __name__ == "__main__":
    key = jax.random.PRNGKey(0)
    k_x, k_e, k_p = jax.random.split(key, 3)

    num_nodes = 256
    in_channels = 16
    out_channels = 8
    num_edges = 512

    x = jax.random.normal(k_x, (num_nodes, in_channels), jnp.float32)
    e = jax.random.randint(k_e, (2, num_edges), 0, num_nodes, jnp.int32)
    edge_index = jnp.concatenate([e, e[::-1]], axis=1)  # undirected

    params = init_params(k_p, in_channels, out_channels)

    # tm=tk=128 -> grid=(2, 2): exercises row tiling + K-reduction epilogue.
    mu, logstd = variational_gcn_encoder(x, edge_index, params, tm=128, tk=128)
    jax.block_until_ready((mu, logstd))

    mu_ref, logstd_ref = _reference_forward(x, edge_index, params)
    assert mu.shape == (num_nodes, out_channels)
    assert logstd.shape == (num_nodes, out_channels)
    assert jnp.allclose(mu, mu_ref, atol=1e-2, rtol=1e-2), float(
        jnp.max(jnp.abs(mu - mu_ref)))
    assert jnp.allclose(logstd, logstd_ref, atol=1e-2, rtol=1e-2), float(
        jnp.max(jnp.abs(logstd - logstd_ref)))

    print("KERNEL_OK")
</pallas_src>

<mosaic_0001>
module attributes {stable_mosaic.version = 11 : i64} {
  func.func @_gcn_fused_kernel(%arg0: i32, %arg1: i32, %arg2: memref<128x128xi8, #tpu.memory_space<vmem>>, %arg3: memref<128x16xbf16, #tpu.memory_space<vmem>>, %arg4: memref<16x128xbf16, #tpu.memory_space<vmem>>, %arg5: memref<1x128xf32, #tpu.memory_space<vmem>>, %arg6: memref<128x1xf32, #tpu.memory_space<vmem>>, %arg7: memref<128x128xbf16, #tpu.memory_space<vmem>>, %arg8: memref<128x128xf32, #tpu.memory_space<vmem>>) attributes {dimension_semantics = [#tpu.dimension_semantics<parallel>, #tpu.dimension_semantics<arbitrary>], iteration_bounds = array<i64: 2, 2>, scalar_prefetch = 0 : i64, scratch_operands = 1 : i64, tpu.core_type = #tpu.core_type<tc>, window_params = [{transform_indices = @transform_0, window_bounds = array<i64: 128, 128>}, {transform_indices = @transform_1, window_bounds = array<i64: 128, 16>}, {pipeline_mode = #tpu.pipeline_mode<synchronous>, transform_indices = @transform_2, window_bounds = array<i64: 16, 128>}, {pipeline_mode = #tpu.pipeline_mode<synchronous>, transform_indices = @transform_3, window_bounds = array<i64: 1, 128>}, {transform_indices = @transform_4, window_bounds = array<i64: 128, 1>}, {transform_indices = @transform_5, window_bounds = array<i64: 128, 128>}]} {
    %c0_i32 = arith.constant 0 : i32
    %0 = arith.cmpi eq, %arg1, %c0_i32 : i32
    %1 = arith.extui %0 : i1 to i32
    %c0_i32_0 = arith.constant 0 : i32
    %2 = arith.cmpi ne, %1, %c0_i32_0 : i32
    scf.if %2 {
      %cst_12 = arith.constant 0.000000e+00 : f32
      %17 = vector.broadcast %cst_12 : f32 to vector<128x128xf32>
      %c0_13 = arith.constant 0 : index
      %c0_14 = arith.constant 0 : index
      %18 = vector.load %arg8[%c0_13, %c0_14] : memref<128x128xf32, #tpu.memory_space<vmem>>, vector<128x128xf32>
      tpu.vector_store %arg8[%c0_13, %c0_14], %17 {strides = array<i32>} : memref<128x128xf32, #tpu.memory_space<vmem>>, vector<128x128xf32>,
    } else {
    }
    %c0 = arith.constant 0 : index
    %c0_1 = arith.constant 0 : index
    %3 = vector.load %arg3[%c0, %c0_1] : memref<128x16xbf16, #tpu.memory_space<vmem>>, vector<128x16xbf16>
    %c0_2 = arith.constant 0 : index
    %c0_3 = arith.constant 0 : index
    %4 = vector.load %arg4[%c0_2, %c0_3] : memref<16x128xbf16, #tpu.memory_space<vmem>>, vector<16x128xbf16>
    %cst = arith.constant dense<0.000000e+00> : vector<128x128xf32>
    %5 = tpu.matmul %3, %4, %cst {dimension_numbers = #tpu.dot_dimension_numbers<[1], [0], [0], [1], [0, 0, 1, 1], [], []>} : vector<128x16xbf16>, vector<16x128xbf16>, vector<128x128xf32> -> vector<128x128xf32>
    %6 = arith.truncf %5 : vector<128x128xf32> to vector<128x128xbf16>
    %c0_4 = arith.constant 0 : index
    %c0_5 = arith.constant 0 : index
    %7 = vector.load %arg2[%c0_4, %c0_5] : memref<128x128xi8, #tpu.memory_space<vmem>>, vector<128x128xi8>
    %8 = arith.sitofp %7 : vector<128x128xi8> to vector<128x128xf32>
    %9 = arith.truncf %8 : vector<128x128xf32> to vector<128x128xbf16>
    %c0_6 = arith.constant 0 : index
    %c0_7 = arith.constant 0 : index
    %10 = vector.load %arg8[%c0_6, %c0_7] : memref<128x128xf32, #tpu.memory_space<vmem>>, vector<128x128xf32>
    %cst_8 = arith.constant dense<0.000000e+00> : vector<128x128xf32>
    %11 = tpu.matmul %9, %6, %cst_8 {dimension_numbers = #tpu.dot_dimension_numbers<[1], [0], [0], [1], [0, 0, 1, 1], [], []>} : vector<128x128xbf16>, vector<128x128xbf16>, vector<128x128xf32> -> vector<128x128xf32>
    %12 = arith.addf %10, %11 : vector<128x128xf32>
    %c0_9 = arith.constant 0 : index
    %c0_10 = arith.constant 0 : index
    %13 = vector.load %arg8[%c0_9, %c0_10] : memref<128x128xf32, #tpu.memory_space<vmem>>, vector<128x128xf32>
    tpu.vector_store %arg8[%c0_9, %c0_10], %12 {strides = array<i32>} : memref<128x128xf32, #tpu.memory_space<vmem>>, vector<128x128xf32>,
    %c1_i32 = arith.constant 1 : i32
    %14 = arith.cmpi eq, %arg1, %c1_i32 : i32
    %15 = arith.extui %14 : i1 to i32
    %c0_i32_11 = arith.constant 0 : i32
    %16 = arith.cmpi ne, %15, %c0_i32_11 : i32
    scf.if %16 {
      %c0_12 = arith.constant 0 : index
      %c0_13 = arith.constant 0 : index
      %17 = vector.load %arg6[%c0_12, %c0_13] : memref<128x1xf32, #tpu.memory_space<vmem>>, vector<128x1xf32>
      %c0_14 = arith.constant 0 : index
      %c0_15 = arith.constant 0 : index
      %18 = vector.load %arg8[%c0_14, %c0_15] : memref<128x128xf32, #tpu.memory_space<vmem>>, vector<128x128xf32>
      %19 = vector.broadcast %17 : vector<128x1xf32> to vector<128x128xf32>
      %20 = arith.mulf %19, %18 : vector<128x128xf32>
      %c0_16 = arith.constant 0 : index
      %c0_17 = arith.constant 0 : index
      %21 = vector.load %arg5[%c0_16, %c0_17] : memref<1x128xf32, #tpu.memory_space<vmem>>, vector<1x128xf32>
      %22 = vector.broadcast %21 : vector<1x128xf32> to vector<128x128xf32>
      %23 = arith.addf %20, %22 : vector<128x128xf32>
      %cst_18 = arith.constant 0.000000e+00 : f32
      %24 = vector.broadcast %cst_18 : f32 to vector<128x128xf32>
      %25 = arith.maximumf %23, %24 : vector<128x128xf32>
      %26 = vector.broadcast %17 : vector<128x1xf32> to vector<128x128xf32>
      %27 = arith.mulf %26, %25 : vector<128x128xf32>
      %28 = arith.truncf %27 : vector<128x128xf32> to vector<128x128xbf16>
      %c0_19 = arith.constant 0 : index
      %c0_20 = arith.constant 0 : index
      %29 = vector.load %arg7[%c0_19, %c0_20] : memref<128x128xbf16, #tpu.memory_space<vmem>>, vector<128x128xbf16>
      tpu.vector_store %arg7[%c0_19, %c0_20], %28 {strides = array<i32>} : memref<128x128xbf16, #tpu.memory_space<vmem>>, vector<128x128xbf16>,
    } else {
    }
    return
  }
  func.func @transform_0(%arg0: i32, %arg1: i32) -> (i32, i32) {
    %c0_i32 = arith.constant 0 : i32
    return %arg0, %arg1 : i32, i32
  }
  func.func @transform_1(%arg0: i32, %arg1: i32) -> (i32, i32) {
    %c0_i32 = arith.constant 0 : i32
    %c0_i32_0 = arith.constant 0 : i32
    return %arg1, %c0_i32 : i32, i32
  }
  func.func @transform_2(%arg0: i32, %arg1: i32) -> (i32, i32) {
    %c0_i32 = arith.constant 0 : i32
    %c0_i32_0 = arith.constant 0 : i32
    %c0_i32_1 = arith.constant 0 : i32
    return %c0_i32, %c0_i32_0 : i32, i32
  }
  func.func @transform_3(%arg0: i32, %arg1: i32) -> (i32, i32) {
    %c0_i32 = arith.constant 0 : i32
    %c0_i32_0 = arith.constant 0 : i32
    %c0_i32_1 = arith.constant 0 : i32
    return %c0_i32, %c0_i32_0 : i32, i32
  }
  func.func @transform_4(%arg0: i32, %arg1: i32) -> (i32, i32) {
    %c0_i32 = arith.constant 0 : i32
    %c0_i32_0 = arith.constant 0 : i32
    return %arg0, %c0_i32 : i32, i32
  }
  func.func @transform_5(%arg0: i32, %arg1: i32) -> (i32, i32) {
    %c0_i32 = arith.constant 0 : i32
    %c0_i32_0 = arith.constant 0 : i32
    return %arg0, %c0_i32 : i32, i32
  }
}

</mosaic_0001>

<llo_original>
// kernel: tpu_custom_call.1
$region0: #{tpu_custom_call.1}
  #allocation0 [shape = 'u32[]', space=smem, size = 0x4, offset = 0x4, fixed_abs, tag = 'smem constant byte address 0x4 - core index']
  #allocation1 [shape = 'u32[144,128]{1,0:T(1,128)}', space=vmem, size = 0x12000, scoped, tag = 'internal scratch']
  #allocation2 [shape = 'f32[128,128]{1,0:T(8,128)}', space=vmem, size = 0x10000, scoped, tag = 'scratch operand']
  %s0 = inlined_call_operand.vmem [shape: s8[256,256], index: 0, kind: input, shape index: {}]
  %s1 = inlined_call_operand.vmem [shape: bf16[256,16], index: 1, kind: input, shape index: {}]
  %s2 = inlined_call_operand.vmem [shape: bf16[16,128], index: 2, kind: input, shape index: {}]
  %s3 = inlined_call_operand.vmem [shape: f32[1,128], index: 3, kind: input, shape index: {}]
  %s4 = inlined_call_operand.vmem [shape: f32[256,1], index: 4, kind: input, shape index: {}]
  %s5 = inlined_call_operand.hbm [shape: bf16[256,128], index: 5, kind: output, shape index: {}]
  %s6 = sld [smem:[#allocation0]]
  $region99: #{tpu_custom_call.1} parent=0
    _
  %s8 = ssub.s32 1, %s6
  %s9 = scalar_select 0, %s8, %s6
  $region1: #{tpu_custom_call.1} parent=0
    #allocation3 [shape = 'u8[32768]{0}', space=vmem, size = 0x8000, scoped, tag = 'input window, operand 0']
    #allocation4 [shape = 'u8[65536]{0}', space=vmem, size = 0x10000, scoped, tag = 'output window, operand 0']
    #allocation5 [shape = 's32[2]{0}', space=sflag, size = 0x8, scoped, tag = 'scoped memory for tpu_custom_call.1']
    %10 = vsyncpa [#allocation5], 0
    %s11 = scalar_lea.sflag [#allocation5], 1
    %12 = vsyncpa %s11, 0
    loop: start=0, step=1, limit=6
    $region2: #{tpu_custom_call.1} parent=1 // loop_pre_header
      _
    $region3: #{tpu_custom_call.1} parent=1 // loop_header
      %s14 = sphi 0, %s18
      %p15 = scmp.ge.s32.totalorder %s14, 6
      %s21 = sphi 0, %s33
      %s22 = sphi 0, %s29
      %s23 = sphi 0, %s21
      %s24 = sphi 0, %s22
      %s25 = sphi 0, %s23
      %s26 = sphi 0, %s24
      %s38 = sphi 0, %s40
      %s41 = sphi 0, %s38
      %s42 = sphi 0, %s41
      %s58 = sphi 0, %s42
      %s64 = sphi 0, %s66
      %s67 = sphi 0, %s64
      %s68 = sphi 0, %s67
      %s84 = sphi 0, %s68
      %s88 = sphi 0, %s88
      %s90 = sphi 0, %s88
      %s91 = sphi 0, %s90
      %s105 = sphi 0, %s91
      %s109 = sphi 0, %s109
      %s111 = sphi 0, %s109
      %s112 = sphi 0, %s111
      %s126 = sphi 0, %s112
      %s132 = sphi 0, %s134
      %s135 = sphi 0, %s132
      %s136 = sphi 0, %s135
      %s152 = sphi 0, %s136
      %s158 = sphi 0, %s160
      %s161 = sphi 0, %s158
      %s162 = sphi 0, %s161
      %s178 = sphi 0, %s162
    $region4: #{tpu_custom_call.1} parent=1 // loop_header_branch
      %17 = sbr.rel (%p15) target = $region8
    $region5: #{tpu_custom_call.1} parent=1 // loop_body
      %s19 = ssub.s32 %s14, 1
      %s20 = ssub.s32 %s14, 2
      %s27 = sadd.s32 1, %s22
      %p28 = scmp.ge.s32.totalorder %s27, 2
      %s29 = scalar_select %p28, 0, %s27
      %s30 = sadd.s32 1, %s21
      %s31 = scalar_select %p28, %s30, %s21
      %p32 = scmp.ge.s32.totalorder %s31, 2
      %s33 = scalar_select %p32, 0, %s31
      %s34 = ssub.s32 %s21, %s33
      %s35 = ssub.s32 %s22, %s29
      %s36 = sor.u32 %s34, %s35
      %p37 = scmp.eq.s32.totalorder %s36, 0
      %s39 = sadd.s32 %s38, 1
      %s40 = scalar_select %p37, %s38, %s39
      %p43 = pneg %p37
      %p44 = scmp.eq.s32.totalorder %s14, 3
      %p45 = por %p43, %p44
      %p46 = scmp.ne.s32.totalorder %s38, %s41
      %p47 = scmp.eq.s32.totalorder %s14, 0
      %p48 = por %p46, %p47
      %p49 = scmp.ne.s32.totalorder %s38, %s41
      %p50 = scmp.eq.s32.totalorder %s19, 3
      %p51 = por %p49, %p50
      %p52 = scmp.ne.s32.totalorder %s41, %s42
      %p53 = scmp.eq.s32.totalorder %s19, 0
      %p54 = por %p52, %p53
      %p55 = scmp.ne.s32.totalorder %s41, %s42
      %p56 = scmp.eq.s32.totalorder %s20, 3
      %p57 = por %p55, %p56
      %p59 = scmp.ne.s32.totalorder %s42, %s58
      %p60 = scmp.eq.s32.totalorder %s20, 0
      %p61 = por %p59, %p60
      %s62 = ssub.s32 %s22, %s29
      %p63 = scmp.eq.s32.totalorder %s62, 0
      %s65 = sadd.s32 %s64, 1
      %s66 = scalar_select %p63, %s64, %s65
      %p69 = pneg %p63
      %p70 = scmp.eq.s32.totalorder %s14, 3
      %p71 = por %p69, %p70
      %p72 = scmp.ne.s32.totalorder %s64, %s67
      %p73 = scmp.eq.s32.totalorder %s14, 0
      %p74 = por %p72, %p73
      %p75 = scmp.ne.s32.totalorder %s64, %s67
      %p76 = scmp.eq.s32.totalorder %s19, 3
      %p77 = por %p75, %p76
      %p78 = scmp.ne.s32.totalorder %s67, %s68
      %p79 = scmp.eq.s32.totalorder %s19, 0
      %p80 = por %p78, %p79
      %p81 = scmp.ne.s32.totalorder %s67, %s68
      %p82 = scmp.eq.s32.totalorder %s20, 3
      %p83 = por %p81, %p82
      %p85 = scmp.ne.s32.totalorder %s68, %s84
      %p86 = scmp.eq.s32.totalorder %s20, 0
      %p87 = por %p85, %p86
      %s89 = sadd.s32 %s88, 1
      %p92 = scmp.eq.s32.totalorder %s14, 3
      %p93 = scmp.ne.s32.totalorder %s88, %s90
      %p94 = scmp.eq.s32.totalorder %s14, 0
      %p95 = por %p93, %p94
      %p96 = scmp.ne.s32.totalorder %s88, %s90
      %p97 = scmp.eq.s32.totalorder %s19, 3
      %p98 = por %p96, %p97
      %p99 = scmp.ne.s32.totalorder %s90, %s91
      %p100 = scmp.eq.s32.totalorder %s19, 0
      %p101 = por %p99, %p100
      %p102 = scmp.ne.s32.totalorder %s90, %s91
      %p103 = scmp.eq.s32.totalorder %s20, 3
      %p104 = por %p102, %p103
      %p106 = scmp.ne.s32.totalorder %s91, %s105
      %p107 = scmp.eq.s32.totalorder %s20, 0
      %p108 = por %p106, %p107
      %s110 = sadd.s32 %s109, 1
      %p113 = scmp.eq.s32.totalorder %s14, 3
      %p114 = scmp.ne.s32.totalorder %s109, %s111
      %p115 = scmp.eq.s32.totalorder %s14, 0
      %p116 = por %p114, %p115
      %p117 = scmp.ne.s32.totalorder %s109, %s111
      %p118 = scmp.eq.s32.totalorder %s19, 3
      %p119 = por %p117, %p118
      %p120 = scmp.ne.s32.totalorder %s111, %s112
      %p121 = scmp.eq.s32.totalorder %s19, 0
      %p122 = por %p120, %p121
      %p123 = scmp.ne.s32.totalorder %s111, %s112
      %p124 = scmp.eq.s32.totalorder %s20, 3
      %p125 = por %p123, %p124
      %p127 = scmp.ne.s32.totalorder %s112, %s126
      %p128 = scmp.eq.s32.totalorder %s20, 0
      %p129 = por %p127, %p128
      %s130 = ssub.s32 %s21, %s33
      %p131 = scmp.eq.s32.totalorder %s130, 0
      %s133 = sadd.s32 %s132, 1
      %s134 = scalar_select %p131, %s132, %s133
      %p137 = pneg %p131
      %p138 = scmp.eq.s32.totalorder %s14, 3
      %p139 = por %p137, %p138
      %p140 = scmp.ne.s32.totalorder %s132, %s135
      %p141 = scmp.eq.s32.totalorder %s14, 0
      %p142 = por %p140, %p141
      %p143 = scmp.ne.s32.totalorder %s132, %s135
      %p144 = scmp.eq.s32.totalorder %s19, 3
      %p145 = por %p143, %p144
      %p146 = scmp.ne.s32.totalorder %s135, %s136
      %p147 = scmp.eq.s32.totalorder %s19, 0
      %p148 = por %p146, %p147
      %p149 = scmp.ne.s32.totalorder %s135, %s136
      %p150 = scmp.eq.s32.totalorder %s20, 3
      %p151 = por %p149, %p150
      %p153 = scmp.ne.s32.totalorder %s136, %s152
      %p154 = scmp.eq.s32.totalorder %s20, 0
      %p155 = por %p153, %p154
      %s156 = ssub.s32 %s21, %s33
      %p157 = scmp.eq.s32.totalorder %s156, 0
      %s159 = sadd.s32 %s158, 1
      %s160 = scalar_select %p157, %s158, %s159
      %p163 = pneg %p157
      %p164 = scmp.eq.s32.totalorder %s14, 3
      %p165 = por %p163, %p164
      %p166 = scmp.ne.s32.totalorder %s158, %s161
      %p167 = scmp.eq.s32.totalorder %s14, 0
      %p168 = por %p166, %p167
      %p169 = scmp.ne.s32.totalorder %s158, %s161
      %p170 = scmp.eq.s32.totalorder %s19, 3
      %p171 = por %p169, %p170
      %p172 = scmp.ne.s32.totalorder %s161, %s162
      %p173 = scmp.eq.s32.totalorder %s19, 0
      %p174 = por %p172, %p173
      %p175 = scmp.ne.s32.totalorder %s161, %s162
      %p176 = scmp.eq.s32.totalorder %s20, 3
      %p177 = por %p175, %p176
      %p179 = scmp.ne.s32.totalorder %s162, %s178
      %p180 = scmp.eq.s32.totalorder %s20, 0
      %p181 = por %p179, %p180
      %p182 = scmp.le.s32.totalorder 1, %s14
      %p183 = scmp.lt.s32.totalorder %s14, 5
      %p184 = pnand %p182, %p183
      %p185 = pneg %p184
      // Predicated region
      $region9: #{tpu_custom_call.1} parent=5 // pred_check
        _
      $region10: #{tpu_custom_call.1} parent=5 // pred_check_branch
        %187 = sbr.rel (%p184) target = $region12
      $region11: #{tpu_custom_call.1} parent=5 // pred_region
        %s188 = ssub.s32 %s14, 1
        // Predicated region
        $region13: #{tpu_custom_call.1} parent=11 // pred_check
          %p189 = pneg %p101
        $region14: #{tpu_custom_call.1} parent=11 // pred_check_branch
          %191 = sbr.rel (%p189) target = $region16
        $region15: #{tpu_custom_call.1} parent=11 // pred_region
          _
        $region16: #{tpu_custom_call.1} parent=11 // pred_fallthru
          _
        // Predicated region
        $region17: #{tpu_custom_call.1} parent=11 // pred_check
          %p192 = pneg %p122
        $region18: #{tpu_custom_call.1} parent=11 // pred_check_branch
          %194 = sbr.rel (%p192) target = $region20
        $region19: #{tpu_custom_call.1} parent=11 // pred_region
          _
        $region20: #{tpu_custom_call.1} parent=11 // pred_fallthru
          _
      $region12: #{tpu_custom_call.1} parent=5 // pred_fallthru
        _
      %p195 = scmp.lt.s32.totalorder %s14, 4
      // Predicated region
      $region21: #{tpu_custom_call.1} parent=5 // pred_check
        %p196 = pneg %p195
      $region22: #{tpu_custom_call.1} parent=5 // pred_check_branch
        %198 = sbr.rel (%p196) target = $region24
      $region23: #{tpu_custom_call.1} parent=5 // pred_region
        // Predicated region
        $region25: #{tpu_custom_call.1} parent=23 // pred_check
          %p199 = pneg %p48
        $region26: #{tpu_custom_call.1} parent=23 // pred_check_branch
          %201 = sbr.rel (%p199) target = $region28
        $region27: #{tpu_custom_call.1} parent=23 // pred_region
          %s202 = sand.u32 %s38, 1
          %s203 = sand.u32 %s38, 1
          %s204 = smul.addr %s203, 32
          %s205 = scalar_lea.vmem [#allocation3], %s204
          %s206 = smul.u32 4, %s21
          %s207 = smul.addr %s206, 2
          %s208 = sadd.s32 %s22, %s207
          %s209 = smul.addr %s208, 8
          %s210 = scalar_lea.vmem %s0, %s209
          // Predicated region
          $region29: #{tpu_custom_call.1} parent=27 // pred_check
            _
          $region30: #{tpu_custom_call.1} parent=27 // pred_check_branch
            %212 = sbr.rel (0) target = $region32
          $region31: #{tpu_custom_call.1} parent=27 // pred_region
            // Predicated region
            $region33: #{tpu_custom_call.1} parent=31 // pred_check
              _
            $region34: #{tpu_custom_call.1} parent=31 // pred_check_branch
              %214 = sbr.rel (0) target = $region36
            $region35: #{tpu_custom_call.1} parent=31 // pred_region
              // Predicated region
              $region48: #{tpu_custom_call.1} parent=35 // pred_check
                _
              $region49: #{tpu_custom_call.1} parent=35 // pred_check_branch
                %236 = sbr.rel (0) target = $region51
              $region50: #{tpu_custom_call.1} parent=35 // pred_region
                loop: start=0, step=1, limit=1
                $region52: #{tpu_custom_call.1} parent=50 // loop_pre_header
                  _
                $region53: #{tpu_custom_call.1} parent=50 // loop_header
                  %s238 = sphi 0, %s242
                  %p239 = scmp.ge.s32.totalorder %s238, 1
                  %s243 = sphi %s210, %s210
                  %s244 = sphi %s205, %s205
                $region54: #{tpu_custom_call.1} parent=50 // loop_header_branch
                  %241 = sbr.rel (%p239) target = $region58
                $region55: #{tpu_custom_call.1} parent=50 // loop_body
                  %v245 = vld [vmem:[%s243] sm:$0xff]
                  %246 = vst [vmem:[%s244] sm:$0xff] %v245
                  %v247 = vld [vmem:[%s243 + $0x10] sm:$0xff]
                  %248 = vst [vmem:[%s244 + $0x8] sm:$0xff] %v247
                  %v249 = vld [vmem:[%s243 + $0x20] sm:$0xff]
                  %250 = vst [vmem:[%s244 + $0x10] sm:$0xff] %v249
                  %v251 = vld [vmem:[%s243 + $0x30] sm:$0xff]
                  %252 = vst [vmem:[%s244 + $0x18] sm:$0xff] %v251
                $region56: #{tpu_custom_call.1} parent=50 // loop_footer
                  %s242 = sadd.s32 1, %s238
                $region57: #{tpu_custom_call.1} parent=50 // loop_footer_branch
                  %237 = sbr.rel target = $region53
                $region58: #{tpu_custom_call.1} parent=50 // loop_exit
                  _
              $region51: #{tpu_custom_call.1} parent=35 // pred_fallthru
                _
              // Predicated region
              $region59: #{tpu_custom_call.1} parent=35 // pred_check
                _
              $region60: #{tpu_custom_call.1} parent=35 // pred_check_branch
                %254 = sbr.rel target = $region62
              $region61: #{tpu_custom_call.1} parent=35 // pred_region
                _
              $region62: #{tpu_custom_call.1} parent=35 // pred_fallthru
                _
            $region36: #{tpu_custom_call.1} parent=31 // pred_fallthru
              _
            // Predicated region
            $region37: #{tpu_custom_call.1} parent=31 // pred_check
              _
            $region38: #{tpu_custom_call.1} parent=31 // pred_check_branch
              %216 = sbr.rel target = $region40
            $region39: #{tpu_custom_call.1} parent=31 // pred_region
              %s218 = ssub.s32 256, 1
              loop: start=0, step=1, limit=1
              $region41: #{tpu_custom_call.1} parent=39 // loop_pre_header
                _
              $region42: #{tpu_custom_call.1} parent=39 // loop_header
                %s220 = sphi 0, %s224
                %p221 = scmp.ge.s32.totalorder %s220, 1
                %s225 = sphi %s210, %s210
                %s226 = sphi %s205, %s205
              $region43: #{tpu_custom_call.1} parent=39 // loop_header_branch
                %223 = sbr.rel (%p221) target = $region47
              $region44: #{tpu_custom_call.1} parent=39 // loop_body
                %v227 = vld [vmem:[%s225] sm:%s218]
                %228 = vst [vmem:[%s226] sm:%s218] %v227
                %v229 = vld [vmem:[%s225 + $0x10] sm:%s218]
                %230 = vst [vmem:[%s226 + $0x8] sm:%s218] %v229
                %v231 = vld [vmem:[%s225 + $0x20] sm:%s218]
                %232 = vst [vmem:[%s226 + $0x10] sm:%s218] %v231
                %v233 = vld [vmem:[%s225 + $0x30] sm:%s218]
                %234 = vst [vmem:[%s226 + $0x18] sm:%s218] %v233
              $region45: #{tpu_custom_call.1} parent=39 // loop_footer
                %s224 = sadd.s32 1, %s220
              $region46: #{tpu_custom_call.1} parent=39 // loop_footer_branch
                %219 = sbr.rel target = $region42
              $region47: #{tpu_custom_call.1} parent=39 // loop_exit
                _
            $region40: #{tpu_custom_call.1} parent=31 // pred_fallthru
              _
          $region32: #{tpu_custom_call.1} parent=27 // pred_fallthru
            _
          %255 = vnop
        $region28: #{tpu_custom_call.1} parent=23 // pred_fallthru
          _
        // Predicated region
        $region63: #{tpu_custom_call.1} parent=23 // pred_check
          %p256 = pneg %p74
        $region64: #{tpu_custom_call.1} parent=23 // pred_check_branch
          %258 = sbr.rel (%p256) target = $region66
        $region65: #{tpu_custom_call.1} parent=23 // pred_region
          %s259 = smul.u32 16, %s22
          %p260 = scmp.lt.s32.totalorder %s259, 31
          %s261 = scalar_select %p260, %s259, 31
          %s262 = smul.addr %s261, 4
          %s263 = scalar_lea.vmem %s1, %s262
          %s264 = smul.u32 16, %s22
        $region66: #{tpu_custom_call.1} parent=23 // pred_fallthru
          _
        // Predicated region
        $region67: #{tpu_custom_call.1} parent=23 // pred_check
          %p265 = pneg %p142
        $region68: #{tpu_custom_call.1} parent=23 // pred_check_branch
          %267 = sbr.rel (%p265) target = $region70
        $region69: #{tpu_custom_call.1} parent=23 // pred_region
          %s268 = smul.u32 16, %s21
          %p269 = scmp.lt.s32.totalorder %s268, 31
          %s270 = scalar_select %p269, %s268, 31
          %s271 = smul.addr %s270, 8
          %s272 = scalar_lea.vmem %s4, %s271
          %s273 = smul.u32 16, %s21
        $region70: #{tpu_custom_call.1} parent=23 // pred_fallthru
          _
      $region24: #{tpu_custom_call.1} parent=5 // pred_fallthru
        _
      %p274 = scmp.le.s32.totalorder 1, %s14
      %p275 = scmp.lt.s32.totalorder %s14, 5
      %p276 = pnand %p274, %p275
      %p277 = pneg %p276
      // Predicated region
      $region71: #{tpu_custom_call.1} parent=5 // pred_check
        _
      $region72: #{tpu_custom_call.1} parent=5 // pred_check_branch
        %279 = sbr.rel (%p276) target = $region74
      $region73: #{tpu_custom_call.1} parent=5 // pred_region
        %s280 = ssub.s32 %s14, 1
        %s281 = sand.u32 %s41, 1
        %s282 = sand.u32 %s41, 1
        %s283 = smul.addr %s282, 32
        %s284 = scalar_lea.vmem [#allocation3], %s283
        // Predicated region
        $region75: #{tpu_custom_call.1} parent=73 // pred_check
          %p285 = pneg %p54
        $region76: #{tpu_custom_call.1} parent=73 // pred_check_branch
          %287 = sbr.rel (%p285) target = $region78
        $region77: #{tpu_custom_call.1} parent=73 // pred_region
          _
        $region78: #{tpu_custom_call.1} parent=73 // pred_fallthru
          _
        %s288 = sand.u32 %s41, 1
        %s289 = sand.u32 %s41, 1
        %s290 = smul.addr %s289, 32
        %s291 = scalar_lea.vmem [#allocation3], %s290
        %p292 = pneg %p54
        %p293 = pneg %p51
        %s294 = smul.u32 16, %s24
        %p295 = scmp.lt.s32.totalorder %s294, 31
        %s296 = scalar_select %p295, %s294, 31
        %s297 = smul.addr %s296, 4
        %s298 = scalar_lea.vmem %s1, %s297
        %p299 = pneg %p80
        %p300 = pneg %p77
        %p301 = pneg %p101
        %p302 = pneg %p98
        %p303 = pneg %p122
        %p304 = pneg %p119
        %s305 = smul.u32 16, %s23
        %p306 = scmp.lt.s32.totalorder %s305, 31
        %s307 = scalar_select %p306, %s305, 31
        %s308 = smul.addr %s307, 8
        %s309 = scalar_lea.vmem %s4, %s308
        %p310 = pneg %p148
        %p311 = pneg %p145
        %p312 = pneg %p174
        %p313 = pneg %p171
        %s314 = sand.u32 %s161, 1
        %s315 = scalar_lea.sflag [#allocation5], %s314
        %s316 = sand.u32 %s161, 1
        %s317 = smul.addr %s316, 64
        %s318 = scalar_lea.vmem [#allocation4], %s317
        %s319 = smul.u32 4, %s23
        %s320 = smul.u32 16, %s24
        %p321 = scmp.lt.s32.totalorder %s320, 31
        %s322 = scalar_select %p321, %s320, 31
        %s323 = smul.addr %s322, 4
        %s324 = scalar_lea.vmem %s1, %s323
        %s325 = smul.u32 16, %s24
        %s326 = smul.u32 16, %s23
        %p327 = scmp.lt.s32.totalorder %s326, 31
        %s328 = scalar_select %p327, %s326, 31
        %s329 = smul.addr %s328, 8
        %s330 = scalar_lea.vmem %s4, %s329
        %s331 = smul.u32 16, %s23
        %s332 = smul.u32 16, %s23
        %p334 = scmp.eq.s32.totalorder %s24, 0
        // Predicated region
        $region79: #{tpu_custom_call.1} parent=73 // pred_check
          %p335 = pneg %p334
        $region80: #{tpu_custom_call.1} parent=73 // pred_check_branch
          %337 = sbr.rel (%p335) target = $region82
        $region81: #{tpu_custom_call.1} parent=73 // pred_region
          %338 = vst [vmem:[#allocation2] sm:$0xff] 0.0
          %339 = vst [vmem:[#allocation2 + $0x8] sm:$0xff] 0.0
          %340 = vst [vmem:[#allocation2 + $0x10] sm:$0xff] 0.0
          %341 = vst [vmem:[#allocation2 + $0x18] sm:$0xff] 0.0
          %342 = vst [vmem:[#allocation2 + $0x20] sm:$0xff] 0.0
          %343 = vst [vmem:[#allocation2 + $0x28] sm:$0xff] 0.0
          %344 = vst [vmem:[#allocation2 + $0x30] sm:$0xff] 0.0
          %345 = vst [vmem:[#allocation2 + $0x38] sm:$0xff] 0.0
          %346 = vst [vmem:[#allocation2 + $0x40] sm:$0xff] 0.0
          %347 = vst [vmem:[#allocation2 + $0x48] sm:$0xff] 0.0
          %348 = vst [vmem:[#allocation2 + $0x50] sm:$0xff] 0.0
          %349 = vst [vmem:[#allocation2 + $0x58] sm:$0xff] 0.0
          %350 = vst [vmem:[#allocation2 + $0x60] sm:$0xff] 0.0
          %351 = vst [vmem:[#allocation2 + $0x68] sm:$0xff] 0.0
          %352 = vst [vmem:[#allocation2 + $0x70] sm:$0xff] 0.0
          %353 = vst [vmem:[#allocation2 + $0x78] sm:$0xff] 0.0
        $region82: #{tpu_custom_call.1} parent=73 // pred_fallthru
          _
        %v354 = vld [vmem:[%s324] sm:$0xf]
        %v355 = vld [vmem:[%s324 + $0x4] sm:$0xf]
        %v356 = vld [vmem:[%s324 + $0x8] sm:$0xf]
        %v357 = vld [vmem:[%s324 + $0xc] sm:$0xf]
        %v358 = vld [vmem:[%s324 + $0x10] sm:$0xf]
        %v359 = vld [vmem:[%s324 + $0x14] sm:$0xf]
        %v360 = vld [vmem:[%s324 + $0x18] sm:$0xf]
        %v361 = vld [vmem:[%s324 + $0x1c] sm:$0xf]
        %v362 = vld [vmem:[%s324 + $0x20] sm:$0xf]
        %v363 = vld [vmem:[%s324 + $0x24] sm:$0xf]
        %v364 = vld [vmem:[%s324 + $0x28] sm:$0xf]
        %v365 = vld [vmem:[%s324 + $0x2c] sm:$0xf]
        %v366 = vld [vmem:[%s324 + $0x30] sm:$0xf]
        %v367 = vld [vmem:[%s324 + $0x34] sm:$0xf]
        %v368 = vld [vmem:[%s324 + $0x38] sm:$0xf]
        %v369 = vld [vmem:[%s324 + $0x3c] sm:$0xf]
        %v370 = vld [vmem:[%s2] sm:$0xf]
        %v371 = vld [vmem:[%s2 + $0x4] sm:$0xf]
        %v388 = vunpack.c.l.b16 %v354
        %v389 = vunpack.c.l.b16 %v355
        %v390 = vunpack.c.l.b16 %v356
        %v391 = vunpack.c.l.b16 %v357
        %v392 = vunpack.c.l.b16 %v358
        %v393 = vunpack.c.l.b16 %v359
        %v394 = vunpack.c.l.b16 %v360
        %v395 = vunpack.c.l.b16 %v361
        %v396 = vunpack.c.l.b16 %v362
        %v397 = vunpack.c.l.b16 %v363
        %v398 = vunpack.c.l.b16 %v364
        %v399 = vunpack.c.l.b16 %v365
        %v400 = vunpack.c.l.b16 %v366
        %v401 = vunpack.c.l.b16 %v367
        %v402 = vunpack.c.l.b16 %v368
        %v403 = vunpack.c.l.b16 %v369
        %v404 = vpack.c.b16 %v389, %v388
        %v405 = vpack.c.b16 %v391, %v390
        %v406 = vpack.c.b16 %v393, %v392
        %v407 = vpack.c.b16 %v395, %v394
        %v408 = vpack.c.b16 %v397, %v396
        %v409 = vpack.c.b16 %v399, %v398
        %v410 = vpack.c.b16 %v401, %v400
        %v411 = vpack.c.b16 %v403, %v402
        %v414 = vunpack.c.l.b16 %v370
        %v415 = vunpack.c.l.b16 %v371
        %v416 = vpack.c.b16 %v415, %v414
        %vm418 = vcmask 130048
        %v420 = vsel %vm418, %v404, 0
        %v423 = vsel %vm418, %v405, 0
        %v426 = vsel %vm418, %v406, 0
        %v429 = vsel %vm418, %v407, 0
        %v432 = vsel %vm418, %v408, 0
        %v435 = vsel %vm418, %v409, 0
        %v438 = vsel %vm418, %v410, 0
        %v441 = vsel %vm418, %v411, 0
        %443 = vmatprep.subr.bf16.mxu0 0
        %444 = vmatpush1.bf16.msra.mxu0 0
        %445 = vmatprep.subr.bf16.mxu0 0
        %446 = vmatpush1.bf16.msra.mxu0 0
        %447 = vmatprep.subr.bf16.mxu0 0
        %448 = vmatpush1.bf16.msra.mxu0 0
        %449 = vmatprep.subr.bf16.mxu0 0
        %450 = vmatpush1.bf16.msra.mxu0 0
        %451 = vmatprep.subr.bf16.mxu0 0
        %452 = vmatpush1.bf16.msra.mxu0 0
        %453 = vmatprep.subr.bf16.mxu0 0
        %454 = vmatpush1.bf16.msra.mxu0 0
        %455 = vmatprep.subr.bf16.mxu0 0
        %456 = vmatpush1.bf16.msra.mxu0 0
        %457 = vmatprep.subr.bf16.mxu0 0
        %458 = vmatpush1.bf16.msra.mxu0 %v416
        %459 = vmatprep.subr.bf16.mxu0 0
        %460 = vmatpush2.bf16.msra.mxu0 0
        %461 = vmatprep.subr.bf16.mxu0 0
        %462 = vmatpush2.bf16.msra.mxu0 0
        %463 = vmatprep.subr.bf16.mxu0 0
        %464 = vmatpush2.bf16.msra.mxu0 0
        %465 = vmatprep.subr.bf16.mxu0 0
        %466 = vmatpush2.bf16.msra.mxu0 0
        %467 = vmatprep.subr.bf16.mxu0 0
        %468 = vmatpush2.bf16.msra.mxu0 0
        %469 = vmatprep.subr.bf16.mxu0 0
        %470 = vmatpush2.bf16.msra.mxu0 0
        %471 = vmatprep.subr.bf16.mxu0 0
        %472 = vmatpush2.bf16.msra.mxu0 0
        %473 = vmatprep.subr.bf16.mxu0 0
        %474 = vmatpush2.bf16.msra.mxu0 0
        %475 = vmatprep.mubr.bf16.mxu0 0
        %476 = vmatmul.mubr.bf16.gmra.mxu0 %v420
        %v477 = vpop.f32.mrf.mxu0
        %v478 = vadd.f32 0.0, %v477
        %v479 = vpop.f32.mrf.mxu0
        %v480 = vpop.f32.mrf.mxu0
        %v481 = vadd.f32 0.0, %v480
        %v482 = vpop.f32.mrf.mxu0
        %483 = vmatprep.mubr.bf16.mxu0 0
        %484 = vmatmul.mubr.bf16.gmra.mxu0 %v423
        %v485 = vpop.f32.mrf.mxu0
        %v486 = vadd.f32 0.0, %v485
        %v487 = vpop.f32.mrf.mxu0
        %v488 = vpop.f32.mrf.mxu0
        %v489 = vadd.f32 0.0, %v488
        %v490 = vpop.f32.mrf.mxu0
        %491 = vmatprep.mubr.bf16.mxu0 0
        %492 = vmatmul.mubr.bf16.gmra.mxu0 %v426
        %v493 = vpop.f32.mrf.mxu0
        %v494 = vadd.f32 0.0, %v493
        %v495 = vpop.f32.mrf.mxu0
        %v496 = vpop.f32.mrf.mxu0
        %v497 = vadd.f32 0.0, %v496
        %v498 = vpop.f32.mrf.mxu0
        %499 = vmatprep.mubr.bf16.mxu0 0
        %500 = vmatmul.mubr.bf16.gmra.mxu0 %v429
        %v501 = vpop.f32.mrf.mxu0
        %v502 = vadd.f32 0.0, %v501
        %v503 = vpop.f32.mrf.mxu0
        %v504 = vpop.f32.mrf.mxu0
        %v505 = vadd.f32 0.0, %v504
        %v506 = vpop.f32.mrf.mxu0
        %507 = vmatprep.mubr.bf16.mxu0 0
        %508 = vmatmul.mubr.bf16.gmra.mxu0 %v432
        %v509 = vpop.f32.mrf.mxu0
        %v510 = vadd.f32 0.0, %v509
        %v511 = vpop.f32.mrf.mxu0
        %v512 = vpop.f32.mrf.mxu0
        %v513 = vadd.f32 0.0, %v512
        %v514 = vpop.f32.mrf.mxu0
        %515 = vmatprep.mubr.bf16.mxu0 0
        %516 = vmatmul.mubr.bf16.gmra.mxu0 %v435
        %v517 = vpop.f32.mrf.mxu0
        %v518 = vadd.f32 0.0, %v517
        %v519 = vpop.f32.mrf.mxu0
        %v520 = vpop.f32.mrf.mxu0
        %v521 = vadd.f32 0.0, %v520
        %v522 = vpop.f32.mrf.mxu0
        %523 = vmatprep.mubr.bf16.mxu0 0
        %524 = vmatmul.mubr.bf16.gmra.mxu0 %v438
        %v525 = vpop.f32.mrf.mxu0
        %v526 = vadd.f32 0.0, %v525
        %v527 = vpop.f32.mrf.mxu0
        %v528 = vpop.f32.mrf.mxu0
        %v529 = vadd.f32 0.0, %v528
        %v530 = vpop.f32.mrf.mxu0
        %531 = vmatprep.mubr.bf16.mxu0 0
        %532 = vmatmul.mubr.bf16.gmra.mxu0 %v441
        %v533 = vpop.f32.mrf.mxu0
        %v534 = vadd.f32 0.0, %v533
        %v535 = vpop.f32.mrf.mxu0
        %v536 = vpop.f32.mrf.mxu0
        %v537 = vadd.f32 0.0, %v536
        %v538 = vpop.f32.mrf.mxu0
        %539 = vdwg.mxu0
        %v540 = vpack.c.bf16 %v481, %v478
        %v541 = vpack.c.bf16 %v489, %v486
        %v542 = vpack.c.bf16 %v497, %v494
        %v543 = vpack.c.bf16 %v505, %v502
        %v544 = vpack.c.bf16 %v513, %v510
        %v545 = vpack.c.bf16 %v521, %v518
        %v546 = vpack.c.bf16 %v529, %v526
        %v547 = vpack.c.bf16 %v537, %v534
        %v548 = vld [vmem:[%s284] sm:$0xff]
        %v549 = vld [vmem:[%s284 + $0x8] sm:$0xff]
        %v550 = vld [vmem:[%s284 + $0x10] sm:$0xff]
        %v551 = vld [vmem:[%s284 + $0x18] sm:$0xff]
        %v552 = vunpack.c.l.s8.bf16 %v548
        %v553 = vunpack.c.h.s8.bf16 %v548
        %v554 = vunpack.c.l.s8.bf16 %v549
        %v555 = vunpack.c.h.s8.bf16 %v549
        %v556 = vunpack.c.l.s8.bf16 %v550
        %v557 = vunpack.c.h.s8.bf16 %v550
        %v558 = vunpack.c.l.s8.bf16 %v551
        %v559 = vunpack.c.h.s8.bf16 %v551
        %v560 = vld [vmem:[#allocation2] sm:$0xff]
        %v561 = vld [vmem:[#allocation2 + $0x8] sm:$0xff]
        %v562 = vld [vmem:[#allocation2 + $0x10] sm:$0xff]
        %v563 = vld [vmem:[#allocation2 + $0x18] sm:$0xff]
        %v564 = vld [vmem:[#allocation2 + $0x20] sm:$0xff]
        %v565 = vld [vmem:[#allocation2 + $0x28] sm:$0xff]
        %v566 = vld [vmem:[#allocation2 + $0x30] sm:$0xff]
        %v567 = vld [vmem:[#allocation2 + $0x38] sm:$0xff]
        %v568 = vld [vmem:[#allocation2 + $0x40] sm:$0xff]
        %v569 = vld [vmem:[#allocation2 + $0x48] sm:$0xff]
        %v570 = vld [vmem:[#allocation2 + $0x50] sm:$0xff]
        %v571 = vld [vmem:[#allocation2 + $0x58] sm:$0xff]
        %v572 = vld [vmem:[#allocation2 + $0x60] sm:$0xff]
        %v573 = vld [vmem:[#allocation2 + $0x68] sm:$0xff]
        %v574 = vld [vmem:[#allocation2 + $0x70] sm:$0xff]
        %v575 = vld [vmem:[#allocation2 + $0x78] sm:$0xff]
        %576 = vmatprep.subr.bf16.mxu0 0
        %577 = vmatpush1.bf16.msra.mxu0 %v547
        %578 = vmatprep.subr.bf16.mxu0 0
        %579 = vmatpush1.bf16.msra.mxu0 %v546
        %580 = vmatprep.subr.bf16.mxu0 0
        %581 = vmatpush1.bf16.msra.mxu0 %v545
        %582 = vmatprep.subr.bf16.mxu0 0
        %583 = vmatpush1.bf16.msra.mxu0 %v544
        %584 = vmatprep.subr.bf16.mxu0 0
        %585 = vmatpush1.bf16.msra.mxu0 %v543
        %586 = vmatprep.subr.bf16.mxu0 0
        %587 = vmatpush1.bf16.msra.mxu0 %v542
        %588 = vmatprep.subr.bf16.mxu0 0
        %589 = vmatpush1.bf16.msra.mxu0 %v541
        %590 = vmatprep.subr.bf16.mxu0 0
        %591 = vmatpush1.bf16.msra.mxu0 %v540
        %592 = vmatprep.subr.bf16.mxu0 0
        %593 = vmatpush2.bf16.msra.mxu0 0
        %594 = vmatprep.subr.bf16.mxu0 0
        %595 = vmatpush2.bf16.msra.mxu0 0
        %596 = vmatprep.subr.bf16.mxu0 0
        %597 = vmatpush2.bf16.msra.mxu0 0
        %598 = vmatprep.subr.bf16.mxu0 0
        %599 = vmatpush2.bf16.msra.mxu0 0
        %600 = vmatprep.subr.bf16.mxu0 0
        %601 = vmatpush2.bf16.msra.mxu0 0
        %602 = vmatprep.subr.bf16.mxu0 0
        %603 = vmatpush2.bf16.msra.mxu0 0
        %604 = vmatprep.subr.bf16.mxu0 0
        %605 = vmatpush2.bf16.msra.mxu0 0
        %606 = vmatprep.subr.bf16.mxu0 0
        %607 = vmatpush2.bf16.msra.mxu0 0
        %608 = vmatprep.mubr.bf16.mxu0 0
        %609 = vmatmul.mubr.bf16.gmra.mxu0 %v552
        %v610 = vpop.f32.mrf.mxu0
        %v611 = vadd.f32 0.0, %v610
        %v612 = vpop.f32.mrf.mxu0
        %v613 = vpop.f32.mrf.mxu0
        %v614 = vadd.f32 0.0, %v613
        %v615 = vpop.f32.mrf.mxu0
        %616 = vmatprep.mubr.bf16.mxu0 0
        %617 = vmatmul.mubr.bf16.gmra.mxu0 %v553
        %v618 = vpop.f32.mrf.mxu0
        %v619 = vadd.f32 0.0, %v618
        %v620 = vpop.f32.mrf.mxu0
        %v621 = vpop.f32.mrf.mxu0
        %v622 = vadd.f32 0.0, %v621
        %v623 = vpop.f32.mrf.mxu0
        %624 = vmatprep.mubr.bf16.mxu0 0
        %625 = vmatmul.mubr.bf16.gmra.mxu0 %v554
        %v626 = vpop.f32.mrf.mxu0
        %v627 = vadd.f32 0.0, %v626
        %v628 = vpop.f32.mrf.mxu0
        %v629 = vpop.f32.mrf.mxu0
        %v630 = vadd.f32 0.0, %v629
        %v631 = vpop.f32.mrf.mxu0
        %632 = vmatprep.mubr.bf16.mxu0 0
        %633 = vmatmul.mubr.bf16.gmra.mxu0 %v555
        %v634 = vpop.f32.mrf.mxu0
        %v635 = vadd.f32 0.0, %v634
        %v636 = vpop.f32.mrf.mxu0
        %v637 = vpop.f32.mrf.mxu0
        %v638 = vadd.f32 0.0, %v637
        %v639 = vpop.f32.mrf.mxu0
        %640 = vmatprep.mubr.bf16.mxu0 0
        %641 = vmatmul.mubr.bf16.gmra.mxu0 %v556
        %v642 = vpop.f32.mrf.mxu0
        %v643 = vadd.f32 0.0, %v642
        %v644 = vpop.f32.mrf.mxu0
        %v645 = vpop.f32.mrf.mxu0
        %v646 = vadd.f32 0.0, %v645
        %v647 = vpop.f32.mrf.mxu0
        %648 = vmatprep.mubr.bf16.mxu0 0
        %649 = vmatmul.mubr.bf16.gmra.mxu0 %v557
        %v650 = vpop.f32.mrf.mxu0
        %v651 = vadd.f32 0.0, %v650
        %v652 = vpop.f32.mrf.mxu0
        %v653 = vpop.f32.mrf.mxu0
        %v654 = vadd.f32 0.0, %v653
        %v655 = vpop.f32.mrf.mxu0
        %656 = vmatprep.mubr.bf16.mxu0 0
        %657 = vmatmul.mubr.bf16.gmra.mxu0 %v558
        %v658 = vpop.f32.mrf.mxu0
        %v659 = vadd.f32 0.0, %v658
        %v660 = vpop.f32.mrf.mxu0
        %v661 = vpop.f32.mrf.mxu0
        %v662 = vadd.f32 0.0, %v661
        %v663 = vpop.f32.mrf.mxu0
        %664 = vmatprep.mubr.bf16.mxu0 0
        %665 = vmatmul.mubr.bf16.gmra.mxu0 %v559
        %v666 = vpop.f32.mrf.mxu0
        %v667 = vadd.f32 0.0, %v666
        %v668 = vpop.f32.mrf.mxu0
        %v669 = vpop.f32.mrf.mxu0
        %v670 = vadd.f32 0.0, %v669
        %v671 = vpop.f32.mrf.mxu0
        %672 = vdwg.mxu0
        %v673 = vadd.f32 %v560, %v611
        %v674 = vadd.f32 %v561, %v614
        %v675 = vadd.f32 %v562, %v619
        %v676 = vadd.f32 %v563, %v622
        %v677 = vadd.f32 %v564, %v627
        %v678 = vadd.f32 %v565, %v630
        %v679 = vadd.f32 %v566, %v635
        %v680 = vadd.f32 %v567, %v638
        %v681 = vadd.f32 %v568, %v643
        %v682 = vadd.f32 %v569, %v646
        %v683 = vadd.f32 %v570, %v651
        %v684 = vadd.f32 %v571, %v654
        %v685 = vadd.f32 %v572, %v659
        %v686 = vadd.f32 %v573, %v662
        %v687 = vadd.f32 %v574, %v667
        %v688 = vadd.f32 %v575, %v670
        %689 = vst [vmem:[#allocation2] sm:$0xff] %v673
        %690 = vst [vmem:[#allocation2 + $0x8] sm:$0xff] %v674
        %691 = vst [vmem:[#allocation2 + $0x10] sm:$0xff] %v675
        %692 = vst [vmem:[#allocation2 + $0x18] sm:$0xff] %v676
        %693 = vst [vmem:[#allocation2 + $0x20] sm:$0xff] %v677
        %694 = vst [vmem:[#allocation2 + $0x28] sm:$0xff] %v678
        %695 = vst [vmem:[#allocation2 + $0x30] sm:$0xff] %v679
        %696 = vst [vmem:[#allocation2 + $0x38] sm:$0xff] %v680
        %697 = vst [vmem:[#allocation2 + $0x40] sm:$0xff] %v681
        %698 = vst [vmem:[#allocation2 + $0x48] sm:$0xff] %v682
        %699 = vst [vmem:[#allocation2 + $0x50] sm:$0xff] %v683
        %700 = vst [vmem:[#allocation2 + $0x58] sm:$0xff] %v684
        %701 = vst [vmem:[#allocation2 + $0x60] sm:$0xff] %v685
        %702 = vst [vmem:[#allocation2 + $0x68] sm:$0xff] %v686
        %703 = vst [vmem:[#allocation2 + $0x70] sm:$0xff] %v687
        %704 = vst [vmem:[#allocation2 + $0x78] sm:$0xff] %v688
        %p705 = scmp.eq.s32.totalorder %s24, 1
        // Predicated region
        $region83: #{tpu_custom_call.1} parent=73 // pred_check
          %p706 = pneg %p705
        $region84: #{tpu_custom_call.1} parent=73 // pred_check_branch
          %708 = sbr.rel (%p706) target = $region86
        $region85: #{tpu_custom_call.1} parent=73 // pred_region
          %v709 = vld [vmem:[%s330] sm:$0xff]
          %v710 = vld [vmem:[%s330 + $0x8] sm:$0xff]
          %v711 = vld [vmem:[%s330 + $0x10] sm:$0xff]
          %v712 = vld [vmem:[%s330 + $0x18] sm:$0xff]
          %v713 = vld [vmem:[%s330 + $0x20] sm:$0xff]
          %v714 = vld [vmem:[%s330 + $0x28] sm:$0xff]
          %v715 = vld [vmem:[%s330 + $0x30] sm:$0xff]
          %v716 = vld [vmem:[%s330 + $0x38] sm:$0xff]
          %v717 = vld [vmem:[%s330 + $0x40] sm:$0xff]
          %v718 = vld [vmem:[%s330 + $0x48] sm:$0xff]
          %v719 = vld [vmem:[%s330 + $0x50] sm:$0xff]
          %v720 = vld [vmem:[%s330 + $0x58] sm:$0xff]
          %v721 = vld [vmem:[%s330 + $0x60] sm:$0xff]
          %v722 = vld [vmem:[%s330 + $0x68] sm:$0xff]
          %v723 = vld [vmem:[%s330 + $0x70] sm:$0xff]
          %v724 = vld [vmem:[%s330 + $0x78] sm:$0xff]
          %v725 = vld [vmem:[#allocation2] sm:$0xff]
          %v726 = vld [vmem:[#allocation2 + $0x8] sm:$0xff]
          %v727 = vld [vmem:[#allocation2 + $0x10] sm:$0xff]
          %v728 = vld [vmem:[#allocation2 + $0x18] sm:$0xff]
          %v729 = vld [vmem:[#allocation2 + $0x20] sm:$0xff]
          %v730 = vld [vmem:[#allocation2 + $0x28] sm:$0xff]
          %v731 = vld [vmem:[#allocation2 + $0x30] sm:$0xff]
          %v732 = vld [vmem:[#allocation2 + $0x38] sm:$0xff]
          %v733 = vld [vmem:[#allocation2 + $0x40] sm:$0xff]
          %v734 = vld [vmem:[#allocation2 + $0x48] sm:$0xff]
          %v735 = vld [vmem:[#allocation2 + $0x50] sm:$0xff]
          %v736 = vld [vmem:[#allocation2 + $0x58] sm:$0xff]
          %v737 = vld [vmem:[#allocation2 + $0x60] sm:$0xff]
          %v738 = vld [vmem:[#allocation2 + $0x68] sm:$0xff]
          %v739 = vld [vmem:[#allocation2 + $0x70] sm:$0xff]
          %v740 = vld [vmem:[#allocation2 + $0x78] sm:$0xff]
          %742 = vset.pattern.permute.xlu0 0
          %743 = vperm.xlu0 %742, %v709
          %v744 = vpop.permute.xlu0 %743
          %747 = vset.pattern.permute.xlu0 0
          %748 = vperm.xlu0 %747, %v710
          %v749 = vpop.permute.xlu0 %748
          %752 = vset.pattern.permute.xlu0 0
          %753 = vperm.xlu0 %752, %v711
          %v754 = vpop.permute.xlu0 %753
          %757 = vset.pattern.permute.xlu0 0
          %758 = vperm.xlu0 %757, %v712
          %v759 = vpop.permute.xlu0 %758
          %762 = vset.pattern.permute.xlu0 0
          %763 = vperm.xlu0 %762, %v713
          %v764 = vpop.permute.xlu0 %763
          %767 = vset.pattern.permute.xlu0 0
          %768 = vperm.xlu0 %767, %v714
          %v769 = vpop.permute.xlu0 %768
          %772 = vset.pattern.permute.xlu0 0
          %773 = vperm.xlu0 %772, %v715
          %v774 = vpop.permute.xlu0 %773
          %777 = vset.pattern.permute.xlu0 0
          %778 = vperm.xlu0 %777, %v716
          %v779 = vpop.permute.xlu0 %778
          %782 = vset.pattern.permute.xlu0 0
          %783 = vperm.xlu0 %782, %v717
          %v784 = vpop.permute.xlu0 %783
          %787 = vset.pattern.permute.xlu0 0
          %788 = vperm.xlu0 %787, %v718
          %v789 = vpop.permute.xlu0 %788
          %792 = vset.pattern.permute.xlu0 0
          %793 = vperm.xlu0 %792, %v719
          %v794 = vpop.permute.xlu0 %793
          %797 = vset.pattern.permute.xlu0 0
          %798 = vperm.xlu0 %797, %v720
          %v799 = vpop.permute.xlu0 %798
          %802 = vset.pattern.permute.xlu0 0
          %803 = vperm.xlu0 %802, %v721
          %v804 = vpop.permute.xlu0 %803
          %807 = vset.pattern.permute.xlu0 0
          %808 = vperm.xlu0 %807, %v722
          %v809 = vpop.permute.xlu0 %808
          %812 = vset.pattern.permute.xlu0 0
          %813 = vperm.xlu0 %812, %v723
          %v814 = vpop.permute.xlu0 %813
          %817 = vset.pattern.permute.xlu0 0
          %818 = vperm.xlu0 %817, %v724
          %v819 = vpop.permute.xlu0 %818
          %v821 = vmul.f32 %v744, %v725
          %v822 = vmul.f32 %v749, %v726
          %v823 = vmul.f32 %v754, %v727
          %v824 = vmul.f32 %v759, %v728
          %v825 = vmul.f32 %v764, %v729
          %v826 = vmul.f32 %v769, %v730
          %v827 = vmul.f32 %v774, %v731
          %v828 = vmul.f32 %v779, %v732
          %v829 = vmul.f32 %v784, %v733
          %v830 = vmul.f32 %v789, %v734
          %v831 = vmul.f32 %v794, %v735
          %v832 = vmul.f32 %v799, %v736
          %v833 = vmul.f32 %v804, %v737
          %v834 = vmul.f32 %v809, %v738
          %v835 = vmul.f32 %v814, %v739
          %v836 = vmul.f32 %v819, %v740
          %v837 = vld [vmem:[%s3] sm:$0x1]
          %v839 = vlaneseq
          %v840 = vshrl.u32 %v839, 7
          %v841 = vsub.s32 0, %v840
          %v842 = vrot.slane %v837, %v841
          %v844 = vadd.f32 %v821, %v842
          %v845 = vadd.f32 %v822, %v842
          %v846 = vadd.f32 %v823, %v842
          %v847 = vadd.f32 %v824, %v842
          %v848 = vadd.f32 %v825, %v842
          %v849 = vadd.f32 %v826, %v842
          %v850 = vadd.f32 %v827, %v842
          %v851 = vadd.f32 %v828, %v842
          %v852 = vadd.f32 %v829, %v842
          %v853 = vadd.f32 %v830, %v842
          %v854 = vadd.f32 %v831, %v842
          %v855 = vadd.f32 %v832, %v842
          %v856 = vadd.f32 %v833, %v842
          %v857 = vadd.f32 %v834, %v842
          %v858 = vadd.f32 %v835, %v842
          %v859 = vadd.f32 %v836, %v842
          %v860 = vmax.f32 %v844, 0.0
          %v861 = vmax.f32 %v845, 0.0
          %v862 = vmax.f32 %v846, 0.0
          %v863 = vmax.f32 %v847, 0.0
          %v864 = vmax.f32 %v848, 0.0
          %v865 = vmax.f32 %v849, 0.0
          %v866 = vmax.f32 %v850, 0.0
          %v867 = vmax.f32 %v851, 0.0
          %v868 = vmax.f32 %v852, 0.0
          %v869 = vmax.f32 %v853, 0.0
          %v870 = vmax.f32 %v854, 0.0
          %v871 = vmax.f32 %v855, 0.0
          %v872 = vmax.f32 %v856, 0.0
          %v873 = vmax.f32 %v857, 0.0
          %v874 = vmax.f32 %v858, 0.0
          %v875 = vmax.f32 %v859, 0.0
          %v876 = vmul.f32 %v744, %v860
          %v877 = vmul.f32 %v749, %v861
          %v878 = vmul.f32 %v754, %v862
          %v879 = vmul.f32 %v759, %v863
          %v880 = vmul.f32 %v764, %v864
          %v881 = vmul.f32 %v769, %v865
          %v882 = vmul.f32 %v774, %v866
          %v883 = vmul.f32 %v779, %v867
          %v884 = vmul.f32 %v784, %v868
          %v885 = vmul.f32 %v789, %v869
          %v886 = vmul.f32 %v794, %v870
          %v887 = vmul.f32 %v799, %v871
          %v888 = vmul.f32 %v804, %v872
          %v889 = vmul.f32 %v809, %v873
          %v890 = vmul.f32 %v814, %v874
          %v891 = vmul.f32 %v819, %v875
          %v892 = vpack.c.bf16 %v877, %v876
          %v893 = vpack.c.bf16 %v879, %v878
          %v894 = vpack.c.bf16 %v881, %v880
          %v895 = vpack.c.bf16 %v883, %v882
          %v896 = vpack.c.bf16 %v885, %v884
          %v897 = vpack.c.bf16 %v887, %v886
          %v898 = vpack.c.bf16 %v889, %v888
          %v899 = vpack.c.bf16 %v891, %v890
          %v908 = vunpack.c.l.b16 %v892
          %v909 = vunpack.c.h.b16 %v892
          %v910 = vunpack.c.l.b16 %v893
          %v911 = vunpack.c.h.b16 %v893
          %v912 = vunpack.c.l.b16 %v894
          %v913 = vunpack.c.h.b16 %v894
          %v914 = vunpack.c.l.b16 %v895
          %v915 = vunpack.c.h.b16 %v895
          %v916 = vunpack.c.l.b16 %v896
          %v917 = vunpack.c.h.b16 %v896
          %v918 = vunpack.c.l.b16 %v897
          %v919 = vunpack.c.h.b16 %v897
          %v920 = vunpack.c.l.b16 %v898
          %v921 = vunpack.c.h.b16 %v898
          %v922 = vunpack.c.l.b16 %v899
          %v923 = vunpack.c.h.b16 %v899
          %v924 = vpack.c.b16 %v908, %v908
          %v925 = vpack.c.b16 %v909, %v909
          %v926 = vpack.c.b16 %v910, %v910
          %v927 = vpack.c.b16 %v911, %v911
          %v928 = vpack.c.b16 %v912, %v912
          %v929 = vpack.c.b16 %v913, %v913
          %v930 = vpack.c.b16 %v914, %v914
          %v931 = vpack.c.b16 %v915, %v915
          %v932 = vpack.c.b16 %v916, %v916
          %v933 = vpack.c.b16 %v917, %v917
          %v934 = vpack.c.b16 %v918, %v918
          %v935 = vpack.c.b16 %v919, %v919
          %v936 = vpack.c.b16 %v920, %v920
          %v937 = vpack.c.b16 %v921, %v921
          %v938 = vpack.c.b16 %v922, %v922
          %v939 = vpack.c.b16 %v923, %v923
          %956 = vst [vmem:[%s318] sm:$0xf] %v924
          %957 = vst [vmem:[%s318 + $0x4] sm:$0xf] %v925
          %958 = vst [vmem:[%s318 + $0x8] sm:$0xf] %v926
          %959 = vst [vmem:[%s318 + $0xc] sm:$0xf] %v927
          %960 = vst [vmem:[%s318 + $0x10] sm:$0xf] %v928
          %961 = vst [vmem:[%s318 + $0x14] sm:$0xf] %v929
          %962 = vst [vmem:[%s318 + $0x18] sm:$0xf] %v930
          %963 = vst [vmem:[%s318 + $0x1c] sm:$0xf] %v931
          %964 = vst [vmem:[%s318 + $0x20] sm:$0xf] %v932
          %965 = vst [vmem:[%s318 + $0x24] sm:$0xf] %v933
          %966 = vst [vmem:[%s318 + $0x28] sm:$0xf] %v934
          %967 = vst [vmem:[%s318 + $0x2c] sm:$0xf] %v935
          %968 = vst [vmem:[%s318 + $0x30] sm:$0xf] %v936
          %969 = vst [vmem:[%s318 + $0x34] sm:$0xf] %v937
          %970 = vst [vmem:[%s318 + $0x38] sm:$0xf] %v938
          %971 = vst [vmem:[%s318 + $0x3c] sm:$0xf] %v939
        $region86: #{tpu_custom_call.1} parent=73 // pred_fallthru
          _
        %s972 = sand.u32 %s161, 1
        %s973 = scalar_lea.sflag [#allocation5], %s972
        %s974 = sand.u32 %s161, 1
        %s975 = smul.addr %s974, 64
        %s976 = scalar_lea.vmem [#allocation4], %s975
        // Predicated region
        $region87: #{tpu_custom_call.1} parent=73 // pred_check
          %p977 = pneg %p171
        $region88: #{tpu_custom_call.1} parent=73 // pred_check_branch
          %979 = sbr.rel (%p977) target = $region90
        $region89: #{tpu_custom_call.1} parent=73 // pred_region
          %s980 = smul.u32 16, %s23
          %s982 = ssub.s32 1024, 1024
          %983 = vsyncadd %s973, %s982
          %s984 = smul.addr %s980, 64
          %s985 = scalar_lea.hbm %s5, %s984
          %s986 = sshll.u32 %s976, 4
          %s987 = int_to_ptr.vmem [resolvable:$true] %s986
          %992 = dma.vmem_to_hbm [thread:$0]  %s987, 1024, %s985, %s973, 64, 64, 4
        $region90: #{tpu_custom_call.1} parent=73 // pred_fallthru
          _
      $region74: #{tpu_custom_call.1} parent=5 // pred_fallthru
        _
      %p993 = scmp.le.s32.totalorder 2, %s14
      // Predicated region
      $region91: #{tpu_custom_call.1} parent=5 // pred_check
        %p994 = pneg %p993
      $region92: #{tpu_custom_call.1} parent=5 // pred_check_branch
        %996 = sbr.rel (%p994) target = $region94
      $region93: #{tpu_custom_call.1} parent=5 // pred_region
        %s997 = ssub.s32 %s14, 2
        // Predicated region
        $region95: #{tpu_custom_call.1} parent=93 // pred_check
          %p998 = pneg %p177
        $region96: #{tpu_custom_call.1} parent=93 // pred_check_branch
          %1000 = sbr.rel (%p998) target = $region98
        $region97: #{tpu_custom_call.1} parent=93 // pred_region
          %s1001 = sand.u32 %s162, 1
          %s1002 = scalar_lea.sflag [#allocation5], %s1001
          %s1003 = sand.u32 %s162, 1
          %s1004 = smul.addr %s1003, 64
          %s1005 = scalar_lea.vmem [#allocation4], %s1004
          %1006 = dma.done %s1002, 1024
        $region98: #{tpu_custom_call.1} parent=93 // pred_fallthru
          _
      $region94: #{tpu_custom_call.1} parent=5 // pred_fallthru
        _
    $region6: #{tpu_custom_call.1} parent=1 // loop_footer
      %s18 = sadd.s32 1, %s14
    $region7: #{tpu_custom_call.1} parent=1 // loop_footer_branch
      %13 = sbr.rel target = $region3
    $region8: #{tpu_custom_call.1} parent=1 // loop_exit
      _
    %1007 = vsyncpa [#allocation5], 1
    %s1008 = scalar_lea.sflag [#allocation5], 1
    %1009 = vsyncpa %s1008, 1

</llo_original>
